<compile_context>
chip_gen: v5e
topology: v5e:2x2
jax: 0.10.0
libtpu: 0.0.40
codegen_flags: <defaults>
</compile_context>

<pallas_src>
import jax
import jax.numpy as jnp
from jax.experimental import pallas as pl
from jax.experimental.pallas import tpu as pltpu


def _round_up(x, m):
    return ((x + m - 1) // m) * m


def embedding_kernel(ids_ref, table_ref, out_ref):
    """One grid step produces embeddings for TM tokens.

    ids_ref   : (1, 1, TM) int32  -- this block's token ids (lane-dense)
    table_ref : (V, H_pad) float32 -- whole (hidden-padded) table, resident
    out_ref   : (TM, H_pad) float32 block (lane-dense stores)
    """
    ids = ids_ref[0]                                   # (1, TM) int32
    V = table_ref.shape[0]
    TM = ids.shape[1]

    # onehot_t[v, t] = (ids[t] == v); cheap sublane-broadcast compare.
    vocab_iota = jax.lax.broadcasted_iota(jnp.int32, (V, TM), 0)
    onehot_t = (vocab_iota == ids).astype(table_ref.dtype)     # (V, TM)

    # out[t, h] = sum_v onehot_t[v, t] * table[v, h]
    # (exact: one nonzero term per output row)
    out = jax.lax.dot_general(
        onehot_t, table_ref[...],
        dimension_numbers=(((0,), (0,)), ((), ())),
        preferred_element_type=jnp.float32)
    out_ref[...] = out.astype(out_ref.dtype)


def symbolic_visual_extractor(v, table, *, tm=512):
    """Equivalent of SymbolicVisualExtractor.forward(v)."""
    orig_shape = v.shape
    V, H = table.shape

    flat = v.reshape(-1).astype(jnp.int32)
    n = flat.shape[0]

    # Token tile: big MXU-sized tiles for large inputs, single lane-aligned
    # step for tiny ones.  Always a multiple of 128 (lane-dense ids loads and
    # sublane-aligned output blocks).
    tm_eff = min(_round_up(tm, 128), _round_up(max(n, 1), 128))
    n_blocks = pl.cdiv(n, tm_eff)
    n_pad = n_blocks * tm_eff
    if n_pad != n:
        flat = jnp.pad(flat, (0, n_pad - n))           # pad ids with 0 (valid row)
    ids3d = flat.reshape(n_blocks, 1, tm_eff)

    # Lane-dense hidden: pad to a multiple of 128 so stores are unmasked and
    # the MXU N-dim is full-width; padding columns are zero and sliced off.
    H_pad = _round_up(H, 128)
    table_p = jnp.pad(table, ((0, 0), (0, H_pad - H))) if H_pad != H else table

    out = pl.pallas_call(
        embedding_kernel,
        out_shape=jax.ShapeDtypeStruct((n_pad, H_pad), table.dtype),
        grid_spec=pltpu.PrefetchScalarGridSpec(
            num_scalar_prefetch=0,
            grid=(n_blocks,),
            in_specs=[
                # per-block ids: pipelined, lane-dense, no manual program_id math
                pl.BlockSpec((1, 1, tm_eff), lambda i: (i, 0, 0)),
                # whole (small) table resident; constant index -> DMA'd once
                pl.BlockSpec((V, H_pad), lambda i: (0, 0)),
            ],
            out_specs=pl.BlockSpec((tm_eff, H_pad), lambda i: (i, 0)),
        ),
        compiler_params=pltpu.CompilerParams(
            dimension_semantics=("parallel",)),
    )(ids3d, table_p)

    out = out[:n, :H]
    return out.reshape(*orig_shape, H)


if __name__ == "__main__":
    vocab_size = 16
    hidden_size = 32
    init_range = 1.0
    B, S = 2, 8

    key = jax.random.PRNGKey(0)
    k_table, k_ids = jax.random.split(key)

    # Deterministic parameter init: Embedding.weight ~ U(-init_range, init_range)
    table = jax.random.uniform(
        k_table, (vocab_size, hidden_size), dtype=jnp.float32,
        minval=-init_range, maxval=init_range)

    # Object-id inputs
    v = jax.random.randint(k_ids, (B, S), 0, vocab_size, dtype=jnp.int32)

    out = symbolic_visual_extractor(v, table)
    out = jax.block_until_ready(out)

    # Reference: plain gather (nn.Embedding semantics)
    ref = jnp.take(table, v, axis=0)
    assert out.shape == (B, S, hidden_size)
    assert jnp.allclose(out, ref), "mismatch vs reference embedding lookup"

    print("KERNEL_OK")
</pallas_src>

<mosaic_0001>
module attributes {stable_mosaic.version = 11 : i64} {
  func.func @embedding_kernel(%arg0: i32, %arg1: memref<1x1x128xi32, #tpu.memory_space<vmem>>, %arg2: memref<16x128xf32, #tpu.memory_space<vmem>>, %arg3: memref<128x128xf32, #tpu.memory_space<vmem>>) attributes {dimension_semantics = [#tpu.dimension_semantics<parallel>], iteration_bounds = array<i64: 1>, scalar_prefetch = 0 : i64, scratch_operands = 0 : i64, tpu.core_type = #tpu.core_type<tc>, window_params = [{transform_indices = @transform_0, window_bounds = array<i64: 1, 1, 128>}, {pipeline_mode = #tpu.pipeline_mode<synchronous>, transform_indices = @transform_1, window_bounds = array<i64: 16, 128>}, {transform_indices = @transform_2, window_bounds = array<i64: 128, 128>}]} {
    %c0 = arith.constant 0 : index
    %c0_0 = arith.constant 0 : index
    %c0_1 = arith.constant 0 : index
    %0 = vector.load %arg1[%c0, %c0_0, %c0_1] : memref<1x1x128xi32, #tpu.memory_space<vmem>>, vector<1x1x128xi32>
    %1 = vector.shape_cast %0 : vector<1x1x128xi32> to vector<1x128xi32>
    %2 = tpu.iota {dimensions = array<i32: 0>} : vector<16x128xi32>
    %3 = vector.broadcast %1 : vector<1x128xi32> to vector<16x128xi32>
    %4 = arith.cmpi eq, %2, %3 : vector<16x128xi32>
    %5 = arith.extui %4 : vector<16x128xi1> to vector<16x128xi32>
    %6 = arith.sitofp %5 : vector<16x128xi32> to vector<16x128xf32>
    %c0_2 = arith.constant 0 : index
    %c0_3 = arith.constant 0 : index
    %7 = vector.load %arg2[%c0_2, %c0_3] : memref<16x128xf32, #tpu.memory_space<vmem>>, vector<16x128xf32>
    %cst = arith.constant dense<0.000000e+00> : vector<128x128xf32>
    %8 = tpu.matmul %6, %7, %cst {dimension_numbers = #tpu.dot_dimension_numbers<[0], [0], [1], [1], [0, 1, 1, 1], [], []>} : vector<16x128xf32>, vector<16x128xf32>, vector<128x128xf32> -> vector<128x128xf32>
    %c0_4 = arith.constant 0 : index
    %c0_5 = arith.constant 0 : index
    %9 = vector.load %arg3[%c0_4, %c0_5] : memref<128x128xf32, #tpu.memory_space<vmem>>, vector<128x128xf32>
    tpu.vector_store %arg3[%c0_4, %c0_5], %8 {strides = array<i32>} : memref<128x128xf32, #tpu.memory_space<vmem>>, vector<128x128xf32>,
    return
  }
  func.func @transform_0(%arg0: i32) -> (i32, i32, i32) {
    %c0_i32 = arith.constant 0 : i32
    %c0_i32_0 = arith.constant 0 : i32
    %c0_i32_1 = arith.constant 0 : i32
    return %arg0, %c0_i32, %c0_i32_0 : i32, i32, i32
  }
  func.func @transform_1(%arg0: i32) -> (i32, i32) {
    %c0_i32 = arith.constant 0 : i32
    %c0_i32_0 = arith.constant 0 : i32
    %c0_i32_1 = arith.constant 0 : i32
    return %c0_i32, %c0_i32_0 : i32, i32
  }
  func.func @transform_2(%arg0: i32) -> (i32, i32) {
    %c0_i32 = arith.constant 0 : i32
    %c0_i32_0 = arith.constant 0 : i32
    return %arg0, %c0_i32 : i32, i32
  }
}

</mosaic_0001>

<llo_original>
// kernel: tpu_custom_call.1
$region0: #{tpu_custom_call.1}
  #allocation0 [shape = 'u32[]', space=smem, size = 0x4, offset = 0x4, fixed_abs, tag = 'smem constant byte address 0x4 - core index']
  #allocation1 [shape = 'u32[72,128]{1,0:T(1,128)}', space=vmem, size = 0x9000, scoped, tag = 'internal scratch']
  %s0 = inlined_call_operand.hbm [shape: s32[1,1,128], index: 0, kind: input, shape index: {}]
  %s1 = inlined_call_operand.hbm [shape: f32[16,128], index: 1, kind: input, shape index: {}]
  %s2 = inlined_call_operand.hbm [shape: f32[128,128], index: 2, kind: output, shape index: {}]
  %s3 = sld [smem:[#allocation0]]
  $region26: #{tpu_custom_call.1} parent=0
    _
  %s5 = ssub.s32 1, %s3
  %s6 = scalar_select 0, %s5, %s3
  $region1: #{tpu_custom_call.1} parent=0
    #allocation2 [shape = 'u8[512]{0}', space=vmem, size = 0x400, scoped, tag = 'input window, operand 0, single buffered']
    #allocation3 [shape = 's32[1]{0}', space=sflag, size = 0x4, scoped, tag = 'scoped memory for tpu_custom_call.1']
    #allocation4 [shape = 's32[1]{0}', space=sflag, size = 0x4, scoped, tag = 'scoped memory for tpu_custom_call.1']
    #allocation5 [shape = 'u8[8192]{0}', space=vmem, size = 0x2000, scoped, tag = 'input window, operand 1, single buffered']
    #allocation6 [shape = 's32[1]{0}', space=sflag, size = 0x4, scoped, tag = 'scoped memory for tpu_custom_call.1']
    #allocation7 [shape = 'u8[65536]{0}', space=vmem, size = 0x10000, scoped, tag = 'output window, operand 0, single buffered']
    %7 = vsyncpa [#allocation3], 0
    %8 = vsyncpa [#allocation6], 0
    %9 = vsyncpa [#allocation4], 0
    // Predicated region
    $region2: #{tpu_custom_call.1} parent=1 // pred_check
      _
    $region3: #{tpu_custom_call.1} parent=1 // pred_check_branch
      %11 = sbr.rel (0) target = $region5
    $region4: #{tpu_custom_call.1} parent=1 // pred_region
      %13 = vsyncadd [#allocation3], 0
      %s15 = sshll.u32 %s0, 4
      %s16 = int_to_ptr.hbm [resolvable:$true] %s15
      %s17 = sshll.u32 [#allocation2], 4
      %s18 = int_to_ptr.vmem [resolvable:$true] %s17
      %20 = dma.hbm_to_vmem [thread:$0]  %s16, 16, %s18, [#allocation3]
    $region5: #{tpu_custom_call.1} parent=1 // pred_fallthru
      _
    // Predicated region
    $region6: #{tpu_custom_call.1} parent=1 // pred_check
      _
    $region7: #{tpu_custom_call.1} parent=1 // pred_check_branch
      %22 = sbr.rel (0) target = $region9
    $region8: #{tpu_custom_call.1} parent=1 // pred_region
      %24 = vsyncadd [#allocation6], 0
      %s25 = sshll.u32 %s1, 4
      %s26 = int_to_ptr.hbm [resolvable:$true] %s25
      %s27 = sshll.u32 [#allocation5], 4
      %s28 = int_to_ptr.vmem [resolvable:$true] %s27
      %33 = dma.hbm_to_vmem [thread:$0]  %s26, 256, %s28, [#allocation6], 128, 128, 8
    $region9: #{tpu_custom_call.1} parent=1 // pred_fallthru
      _
    // Predicated region
    $region10: #{tpu_custom_call.1} parent=1 // pred_check
      _
    $region11: #{tpu_custom_call.1} parent=1 // pred_check_branch
      %35 = sbr.rel (0) target = $region13
    $region12: #{tpu_custom_call.1} parent=1 // pred_region
      %37 = dma.done [#allocation3], 16
    $region13: #{tpu_custom_call.1} parent=1 // pred_fallthru
      _
    // Predicated region
    $region14: #{tpu_custom_call.1} parent=1 // pred_check
      _
    $region15: #{tpu_custom_call.1} parent=1 // pred_check_branch
      %39 = sbr.rel (0) target = $region17
    $region16: #{tpu_custom_call.1} parent=1 // pred_region
      %41 = dma.done [#allocation6], 256
    $region17: #{tpu_custom_call.1} parent=1 // pred_fallthru
      _
    %v42 = vld [vmem:[#allocation2] sm:$0x1]
    %v43 = vlaneseq
    %v44 = vshrl.u32 %v43, 7
    %v45 = vadd.s32 %v44, 8
    %v46 = vperm.slane %v42, 0
    %vm47 = vcmp.eq.s32.totalorder %v44, %v46
    %vm48 = vcmp.eq.s32.totalorder %v45, %v46
    %v49 = vsel %vm47, 1, 0
    %v50 = vsel %vm48, 1, 0
    %v51 = vcvt.s32.f32 %v49
    %v52 = vcvt.s32.f32 %v50
    %v53 = vld [vmem:[#allocation5] sm:$0xff]
    %v54 = vld [vmem:[#allocation5 + $0x8] sm:$0xff]
    %55 = vxpose.xlu0.b32.start [1/16] %v51, 128
    %56 = vxpose.xlu0.b32.cont [2/16] %v52, 128
    %57 = vxpose.xlu0.b32.cont [3/16] 0.0, 128
    %58 = vxpose.xlu0.b32.cont [4/16] 0.0, 128
    %59 = vxpose.xlu0.b32.cont [5/16] 0.0, 128
    %60 = vxpose.xlu0.b32.cont [6/16] 0.0, 128
    %61 = vxpose.xlu0.b32.cont [7/16] 0.0, 128
    %62 = vxpose.xlu0.b32.cont [8/16] 0.0, 128
    %63 = vxpose.xlu0.b32.cont [9/16] 0.0, 128
    %64 = vxpose.xlu0.b32.cont [10/16] 0.0, 128
    %65 = vxpose.xlu0.b32.cont [11/16] 0.0, 128
    %66 = vxpose.xlu0.b32.cont [12/16] 0.0, 128
    %67 = vxpose.xlu0.b32.cont [13/16] 0.0, 128
    %68 = vxpose.xlu0.b32.cont [14/16] 0.0, 128
    %69 = vxpose.xlu0.b32.cont [15/16] 0.0, 128
    %70 = vxpose.xlu0.b32.end [16/16] 0.0, 128
    %v71 = vpop.trf.xlu0
    %v72 = vpop.trf.xlu0
    %v73 = vpop.trf.xlu0
    %v74 = vpop.trf.xlu0
    %v75 = vpop.trf.xlu0
    %v76 = vpop.trf.xlu0
    %v77 = vpop.trf.xlu0
    %v78 = vpop.trf.xlu0
    %v79 = vpop.trf.xlu0
    %v80 = vpop.trf.xlu0
    %v81 = vpop.trf.xlu0
    %v82 = vpop.trf.xlu0
    %v83 = vpop.trf.xlu0
    %v84 = vpop.trf.xlu0
    %v85 = vpop.trf.xlu0
    %v86 = vpop.trf.xlu0
    %vm87 = vcmask 130048
    %v89 = vsel %vm87, %v71, 0
    %v92 = vsel %vm87, %v72, 0
    %v95 = vsel %vm87, %v73, 0
    %v98 = vsel %vm87, %v74, 0
    %v101 = vsel %vm87, %v75, 0
    %v104 = vsel %vm87, %v76, 0
    %v107 = vsel %vm87, %v77, 0
    %v110 = vsel %vm87, %v78, 0
    %v113 = vsel %vm87, %v79, 0
    %v116 = vsel %vm87, %v80, 0
    %v119 = vsel %vm87, %v81, 0
    %v122 = vsel %vm87, %v82, 0
    %v125 = vsel %vm87, %v83, 0
    %v128 = vsel %vm87, %v84, 0
    %v131 = vsel %vm87, %v85, 0
    %v134 = vsel %vm87, %v86, 0
    %136 = vmatpush.msra.mxu0 0.0
    %137 = vmatpush.msra.mxu0 0.0
    %138 = vmatpush.msra.mxu0 0.0
    %139 = vmatpush.msra.mxu0 0.0
    %140 = vmatpush.msra.mxu0 0.0
    %141 = vmatpush.msra.mxu0 0.0
    %142 = vmatpush.msra.mxu0 0.0
    %143 = vmatpush.msra.mxu0 0.0
    %144 = vmatpush.msra.mxu0 0.0
    %145 = vmatpush.msra.mxu0 0.0
    %146 = vmatpush.msra.mxu0 0.0
    %147 = vmatpush.msra.mxu0 0.0
    %148 = vmatpush.msra.mxu0 0.0
    %149 = vmatpush.msra.mxu0 0.0
    %150 = vmatpush.msra.mxu0 %v54
    %151 = vmatpush.msra.mxu0 %v53
    %152 = vmatmul.f32.gmra.mxu0 %v89
    %v153 = vpop.f32.mrf.mxu0
    %v154 = vadd.f32 0.0, %v153
    %155 = vmatmul.f32.gmra.mxu0 %v92
    %v156 = vpop.f32.mrf.mxu0
    %v157 = vadd.f32 0.0, %v156
    %158 = vmatmul.f32.gmra.mxu0 %v95
    %v159 = vpop.f32.mrf.mxu0
    %v160 = vadd.f32 0.0, %v159
    %161 = vmatmul.f32.gmra.mxu0 %v98
    %v162 = vpop.f32.mrf.mxu0
    %v163 = vadd.f32 0.0, %v162
    %164 = vmatmul.f32.gmra.mxu0 %v101
    %v165 = vpop.f32.mrf.mxu0
    %v166 = vadd.f32 0.0, %v165
    %167 = vmatmul.f32.gmra.mxu0 %v104
    %v168 = vpop.f32.mrf.mxu0
    %v169 = vadd.f32 0.0, %v168
    %170 = vmatmul.f32.gmra.mxu0 %v107
    %v171 = vpop.f32.mrf.mxu0
    %v172 = vadd.f32 0.0, %v171
    %173 = vmatmul.f32.gmra.mxu0 %v110
    %v174 = vpop.f32.mrf.mxu0
    %v175 = vadd.f32 0.0, %v174
    %176 = vmatmul.f32.gmra.mxu0 %v113
    %v177 = vpop.f32.mrf.mxu0
    %v178 = vadd.f32 0.0, %v177
    %179 = vmatmul.f32.gmra.mxu0 %v116
    %v180 = vpop.f32.mrf.mxu0
    %v181 = vadd.f32 0.0, %v180
    %182 = vmatmul.f32.gmra.mxu0 %v119
    %v183 = vpop.f32.mrf.mxu0
    %v184 = vadd.f32 0.0, %v183
    %185 = vmatmul.f32.gmra.mxu0 %v122
    %v186 = vpop.f32.mrf.mxu0
    %v187 = vadd.f32 0.0, %v186
    %188 = vmatmul.f32.gmra.mxu0 %v125
    %v189 = vpop.f32.mrf.mxu0
    %v190 = vadd.f32 0.0, %v189
    %191 = vmatmul.f32.gmra.mxu0 %v128
    %v192 = vpop.f32.mrf.mxu0
    %v193 = vadd.f32 0.0, %v192
    %194 = vmatmul.f32.gmra.mxu0 %v131
    %v195 = vpop.f32.mrf.mxu0
    %v196 = vadd.f32 0.0, %v195
    %197 = vmatmul.f32.gmra.mxu0 %v134
    %v198 = vpop.f32.mrf.mxu0
    %v199 = vadd.f32 0.0, %v198
    %200 = vdwg.mxu0
    %201 = vst [vmem:[#allocation7] sm:$0xff] %v154
    %202 = vst [vmem:[#allocation7 + $0x8] sm:$0xff] %v157
    %203 = vst [vmem:[#allocation7 + $0x10] sm:$0xff] %v160
    %204 = vst [vmem:[#allocation7 + $0x18] sm:$0xff] %v163
    %205 = vst [vmem:[#allocation7 + $0x20] sm:$0xff] %v166
    %206 = vst [vmem:[#allocation7 + $0x28] sm:$0xff] %v169
    %207 = vst [vmem:[#allocation7 + $0x30] sm:$0xff] %v172
    %208 = vst [vmem:[#allocation7 + $0x38] sm:$0xff] %v175
    %209 = vst [vmem:[#allocation7 + $0x40] sm:$0xff] %v178
    %210 = vst [vmem:[#allocation7 + $0x48] sm:$0xff] %v181
    %211 = vst [vmem:[#allocation7 + $0x50] sm:$0xff] %v184
    %212 = vst [vmem:[#allocation7 + $0x58] sm:$0xff] %v187
    %213 = vst [vmem:[#allocation7 + $0x60] sm:$0xff] %v190
    %214 = vst [vmem:[#allocation7 + $0x68] sm:$0xff] %v193
    %215 = vst [vmem:[#allocation7 + $0x70] sm:$0xff] %v196
    %216 = vst [vmem:[#allocation7 + $0x78] sm:$0xff] %v199
    // Predicated region
    $region18: #{tpu_custom_call.1} parent=1 // pred_check
      _
    $region19: #{tpu_custom_call.1} parent=1 // pred_check_branch
      %218 = sbr.rel (0) target = $region21
    $region20: #{tpu_custom_call.1} parent=1 // pred_region
      %220 = vsyncadd [#allocation4], 0
      %s221 = sshll.u32 [#allocation7], 4
      %s222 = int_to_ptr.vmem [resolvable:$true] %s221
      %s223 = sshll.u32 %s2, 4
      %s224 = int_to_ptr.hbm [resolvable:$true] %s223
      %229 = dma.vmem_to_hbm [thread:$0]  %s222, 2048, %s224, [#allocation4], 128, 128, 8
    $region21: #{tpu_custom_call.1} parent=1 // pred_fallthru
      _
    // Predicated region
    $region22: #{tpu_custom_call.1} parent=1 // pred_check
      _
    $region23: #{tpu_custom_call.1} parent=1 // pred_check_branch
      %231 = sbr.rel (0) target = $region25
    $region24: #{tpu_custom_call.1} parent=1 // pred_region
      %233 = dma.done [#allocation4], 2048
    $region25: #{tpu_custom_call.1} parent=1 // pred_fallthru
      _
    %234 = vsyncpa [#allocation3], 1
    %235 = vsyncpa [#allocation6], 1
    %236 = vsyncpa [#allocation4], 1

</llo_original>
